<compile_context>
chip_gen: v7x
topology: tpu7x:2x2x1
jax: 0.10.0
libtpu: 0.0.40
codegen_flags: <defaults>
</compile_context>

<pallas_src>
import jax
import jax.numpy as jnp
from jax.experimental import pallas as pl
from jax.experimental.pallas import tpu as pltpu


def mlp_kernel(x_ref, w1_ref, b1_ref, w2_ref, b2_ref, w3_ref, b3_ref, o_ref):
    # x tile: (TM, 32).  No-op cast if the caller already streams bf16.
    x = x_ref[...].astype(jnp.bfloat16)

    # Layer 1: (TM,32) @ (32,128), f32 accumulate, bias+ReLU in f32.
    h1 = jnp.dot(x, w1_ref[...], preferred_element_type=jnp.float32)
    h1 = jnp.maximum(h1 + b1_ref[...], 0.0)

    # Layer 2: (TM,128) @ (128,128).
    h2 = jnp.dot(h1.astype(jnp.bfloat16), w2_ref[...],
                 preferred_element_type=jnp.float32)
    h2 = jnp.maximum(h2 + b2_ref[...], 0.0)

    # Layer 3: logits[n] = <h2[n,:], w3>.  Computed as w3_row . h2^T so the
    # result is a lane-dense (1, TM) row (same contraction pattern as q @ k^T).
    logits = jnp.einsum('od,nd->on', w3_ref[...], h2.astype(jnp.bfloat16),
                        preferred_element_type=jnp.float32)
    logits = logits + b3_ref[0, 0]                       # scalar bias from SMEM

    o_ref[...] = jax.nn.sigmoid(logits).reshape(o_ref.shape).astype(o_ref.dtype)


def prepare_params(params):
    """One-time (hoisted out of the hot path) cast of torch-style f32 params
    into the layout the kernel consumes: bf16 MXU weights, f32 biases,
    w3 as a (1,128) row, b3 as a (1,1) SMEM scalar."""
    w1, b1, w2, b2, w3, b3 = params
    return (
        w1.astype(jnp.bfloat16),
        b1.astype(jnp.float32),
        w2.astype(jnp.bfloat16),
        b2.astype(jnp.float32),
        w3.reshape(1, -1).astype(jnp.bfloat16),
        b3.reshape(1, 1).astype(jnp.float32),
    )


def mlp_forward(x, kparams, *, tm=2048, x_buffer_count=None,
                vmem_limit_bytes=None):
    """x: (B, 32), preferably bf16 (f32 also works).  kparams from
    prepare_params().  Returns (B, 1) f32 = sigmoid(MLP(x))."""
    w1b, b1, w2b, b2, w3b, b3s = kparams
    B, F = x.shape

    # Tiny batches: one full-array block (block dims == array dims is always
    # legal); otherwise keep the requested (8-aligned) tile and let Pallas
    # handle the ragged last tile -- no jnp.pad / extra HBM copy of x.
    if B <= tm:
        tm = B
    G = pl.cdiv(B, tm)

    x_spec_kwargs = {}
    if x_buffer_count is not None:
        # Deeper input buffering; only worth it if xprof shows exposed DMA.
        x_spec_kwargs["pipeline_mode"] = pl.Buffered(x_buffer_count)

    out = pl.pallas_call(
        mlp_kernel,
        out_shape=jax.ShapeDtypeStruct((G, 1, tm), jnp.float32),
        grid=(G,),
        in_specs=[
            pl.BlockSpec((tm, F), lambda i: (i, 0), **x_spec_kwargs),  # x stream
            pl.BlockSpec(w1b.shape, lambda i: (0, 0)),        # weights/biases:
            pl.BlockSpec(b1.shape, lambda i: (0, 0)),         #   constant block
            pl.BlockSpec(w2b.shape, lambda i: (0, 0)),        #   -> VMEM-resident
            pl.BlockSpec(b2.shape, lambda i: (0, 0)),
            pl.BlockSpec(w3b.shape, lambda i: (0, 0)),
            pl.BlockSpec(memory_space=pltpu.MemorySpace.SMEM),  # b3 scalar
        ],
        out_specs=pl.BlockSpec((1, 1, tm), lambda i: (i, 0, 0)),
        compiler_params=pltpu.CompilerParams(
            # On v7x check that this actually shards across both TensorCores;
            # if not, switch to pltpu.CORE_PARALLEL.
            dimension_semantics=("parallel",),
            vmem_limit_bytes=vmem_limit_bytes,
        ),
    )(x, w1b, b1, w2b, b2, w3b, b3s)

    return out.reshape(G * tm, 1)[:B]


def init_params(key):
    """torch.nn.Linear-style init: U(-1/sqrt(fan_in), 1/sqrt(fan_in)).
    Weights stored as (in_features, out_features)."""
    ks = jax.random.split(key, 6)

    def linear(kw, kb, fan_in, fan_out):
        bound = 1.0 / jnp.sqrt(float(fan_in))
        w = jax.random.uniform(kw, (fan_in, fan_out), jnp.float32, -bound, bound)
        b = jax.random.uniform(kb, (1, fan_out), jnp.float32, -bound, bound)
        return w, b

    w1, b1 = linear(ks[0], ks[1], 32, 128)
    w2, b2 = linear(ks[2], ks[3], 128, 128)
    w3, b3 = linear(ks[4], ks[5], 128, 1)
    return (w1, b1, w2, b2, w3, b3)


def mlp_reference(x, params):
    w1, b1, w2, b2, w3, b3 = params
    h = jnp.maximum(x @ w1 + b1, 0.0)
    h = jnp.maximum(h @ w2 + b2, 0.0)
    return jax.nn.sigmoid(h @ w3 + b3)


if __name__ == "__main__":
    key = jax.random.PRNGKey(0)
    k_params, k_x = jax.random.split(key)

    params = init_params(k_params)          # f32 torch-style params
    kparams = prepare_params(params)        # hoisted one-time bf16 cast/reshape

    # Small deterministic test.  Batch deliberately not a tile multiple to
    # exercise the pad-free ragged last tile; production would use tm>=2048.
    batch = 200
    x_f32 = jax.random.normal(k_x, (batch, 32), dtype=jnp.float32)
    x = x_f32.astype(jnp.bfloat16)          # producer hands bf16 -> half x DMA

    # (a) 2-step grid with a ragged tail tile; (b) default tm clamped to batch.
    out_ragged = jax.block_until_ready(mlp_forward(x, kparams, tm=128))
    out_single = jax.block_until_ready(mlp_forward(x, kparams))

    ref = mlp_reference(x_f32, params)

    for out in (out_ragged, out_single):
        assert out.shape == (batch, 1), out.shape
        max_err = float(jnp.max(jnp.abs(out - ref)))
        # bf16 MXU operands / bf16 x vs f32 reference -> ~1e-2 level deviation.
        assert max_err < 2e-2, f"max abs err {max_err}"

    print("KERNEL_OK")
</pallas_src>

<mosaic_0001>
module attributes {stable_mosaic.version = 11 : i64} {
  func.func @mlp_kernel(%arg0: i32, %arg1: memref<128x32xbf16, #tpu.memory_space<vmem>>, %arg2: memref<32x128xbf16, #tpu.memory_space<vmem>>, %arg3: memref<1x128xf32, #tpu.memory_space<vmem>>, %arg4: memref<128x128xbf16, #tpu.memory_space<vmem>>, %arg5: memref<1x128xf32, #tpu.memory_space<vmem>>, %arg6: memref<1x128xbf16, #tpu.memory_space<vmem>>, %arg7: memref<1x1xf32, #tpu.memory_space<smem>>, %arg8: memref<1x1x128xf32, #tpu.memory_space<vmem>>) attributes {dimension_semantics = [#tpu.dimension_semantics<parallel>], iteration_bounds = array<i64: 2>, scalar_prefetch = 0 : i64, scratch_operands = 0 : i64, tpu.core_type = #tpu.core_type<tc>, window_params = [{transform_indices = @transform_0, window_bounds = array<i64: 128, 32>}, {pipeline_mode = #tpu.pipeline_mode<synchronous>, transform_indices = @transform_1, window_bounds = array<i64: 32, 128>}, {pipeline_mode = #tpu.pipeline_mode<synchronous>, transform_indices = @transform_2, window_bounds = array<i64: 1, 128>}, {pipeline_mode = #tpu.pipeline_mode<synchronous>, transform_indices = @transform_3, window_bounds = array<i64: 128, 128>}, {pipeline_mode = #tpu.pipeline_mode<synchronous>, transform_indices = @transform_4, window_bounds = array<i64: 1, 128>}, {pipeline_mode = #tpu.pipeline_mode<synchronous>, transform_indices = @transform_5, window_bounds = array<i64: 1, 128>}, {transform_indices = @transform_6, window_bounds = array<i64: 1, 1>}, {transform_indices = @transform_7, window_bounds = array<i64: 1, 1, 128>}]} {
    %c0 = arith.constant 0 : index
    %c0_0 = arith.constant 0 : index
    %0 = vector.load %arg1[%c0, %c0_0] : memref<128x32xbf16, #tpu.memory_space<vmem>>, vector<128x32xbf16>
    %c0_1 = arith.constant 0 : index
    %c0_2 = arith.constant 0 : index
    %1 = vector.load %arg2[%c0_1, %c0_2] : memref<32x128xbf16, #tpu.memory_space<vmem>>, vector<32x128xbf16>
    %cst = arith.constant dense<0.000000e+00> : vector<128x128xf32>
    %2 = tpu.matmul %0, %1, %cst {dimension_numbers = #tpu.dot_dimension_numbers<[1], [0], [0], [1], [0, 0, 1, 1], [], []>} : vector<128x32xbf16>, vector<32x128xbf16>, vector<128x128xf32> -> vector<128x128xf32>
    %c0_3 = arith.constant 0 : index
    %c0_4 = arith.constant 0 : index
    %3 = vector.load %arg3[%c0_3, %c0_4] : memref<1x128xf32, #tpu.memory_space<vmem>>, vector<1x128xf32>
    %4 = vector.broadcast %3 : vector<1x128xf32> to vector<128x128xf32>
    %5 = arith.addf %2, %4 : vector<128x128xf32>
    %cst_5 = arith.constant 0.000000e+00 : f32
    %6 = vector.broadcast %cst_5 : f32 to vector<128x128xf32>
    %7 = arith.maximumf %5, %6 : vector<128x128xf32>
    %8 = arith.truncf %7 : vector<128x128xf32> to vector<128x128xbf16>
    %c0_6 = arith.constant 0 : index
    %c0_7 = arith.constant 0 : index
    %9 = vector.load %arg4[%c0_6, %c0_7] : memref<128x128xbf16, #tpu.memory_space<vmem>>, vector<128x128xbf16>
    %cst_8 = arith.constant dense<0.000000e+00> : vector<128x128xf32>
    %10 = tpu.matmul %8, %9, %cst_8 {dimension_numbers = #tpu.dot_dimension_numbers<[1], [0], [0], [1], [0, 0, 1, 1], [], []>} : vector<128x128xbf16>, vector<128x128xbf16>, vector<128x128xf32> -> vector<128x128xf32>
    %c0_9 = arith.constant 0 : index
    %c0_10 = arith.constant 0 : index
    %11 = vector.load %arg5[%c0_9, %c0_10] : memref<1x128xf32, #tpu.memory_space<vmem>>, vector<1x128xf32>
    %12 = vector.broadcast %11 : vector<1x128xf32> to vector<128x128xf32>
    %13 = arith.addf %10, %12 : vector<128x128xf32>
    %cst_11 = arith.constant 0.000000e+00 : f32
    %14 = vector.broadcast %cst_11 : f32 to vector<128x128xf32>
    %15 = arith.maximumf %13, %14 : vector<128x128xf32>
    %c0_12 = arith.constant 0 : index
    %c0_13 = arith.constant 0 : index
    %16 = vector.load %arg6[%c0_12, %c0_13] : memref<1x128xbf16, #tpu.memory_space<vmem>>, vector<1x128xbf16>
    %17 = arith.truncf %15 : vector<128x128xf32> to vector<128x128xbf16>
    "tpu.trace_start"() <{level = 10 : i32, message = "od,nd->on"}> : () -> ()
    %cst_14 = arith.constant dense<0.000000e+00> : vector<1x128xf32>
    %18 = tpu.matmul %16, %17, %cst_14 {dimension_numbers = #tpu.dot_dimension_numbers<[1], [1], [0], [0], [0, 0, 1, 0], [], []>} : vector<1x128xbf16>, vector<128x128xbf16>, vector<1x128xf32> -> vector<1x128xf32>
    "tpu.trace_stop"() : () -> ()
    %c0_15 = arith.constant 0 : index
    %c0_16 = arith.constant 0 : index
    %19 = memref.load %arg7[%c0_15, %c0_16] : memref<1x1xf32, #tpu.memory_space<smem>>
    %20 = vector.broadcast %19 : f32 to vector<1x128xf32>
    %21 = arith.addf %18, %20 : vector<1x128xf32>
    %22 = arith.negf %21 : vector<1x128xf32>
    %23 = math.exp %22 : vector<1x128xf32>
    %cst_17 = arith.constant 1.000000e+00 : f32
    %24 = vector.broadcast %cst_17 : f32 to vector<1x128xf32>
    %25 = arith.addf %24, %23 : vector<1x128xf32>
    %26 = arith.divf %24, %25 : vector<1x128xf32>
    %27 = vector.shape_cast %26 : vector<1x128xf32> to vector<1x1x128xf32>
    %c0_18 = arith.constant 0 : index
    %c0_19 = arith.constant 0 : index
    %c0_20 = arith.constant 0 : index
    %28 = vector.load %arg8[%c0_18, %c0_19, %c0_20] : memref<1x1x128xf32, #tpu.memory_space<vmem>>, vector<1x1x128xf32>
    tpu.vector_store %arg8[%c0_18, %c0_19, %c0_20], %27 {strides = array<i32>} : memref<1x1x128xf32, #tpu.memory_space<vmem>>, vector<1x1x128xf32>,
    return
  }
  func.func @transform_0(%arg0: i32) -> (i32, i32) {
    %c0_i32 = arith.constant 0 : i32
    %c0_i32_0 = arith.constant 0 : i32
    return %arg0, %c0_i32 : i32, i32
  }
  func.func @transform_1(%arg0: i32) -> (i32, i32) {
    %c0_i32 = arith.constant 0 : i32
    %c0_i32_0 = arith.constant 0 : i32
    %c0_i32_1 = arith.constant 0 : i32
    return %c0_i32, %c0_i32_0 : i32, i32
  }
  func.func @transform_2(%arg0: i32) -> (i32, i32) {
    %c0_i32 = arith.constant 0 : i32
    %c0_i32_0 = arith.constant 0 : i32
    %c0_i32_1 = arith.constant 0 : i32
    return %c0_i32, %c0_i32_0 : i32, i32
  }
  func.func @transform_3(%arg0: i32) -> (i32, i32) {
    %c0_i32 = arith.constant 0 : i32
    %c0_i32_0 = arith.constant 0 : i32
    %c0_i32_1 = arith.constant 0 : i32
    return %c0_i32, %c0_i32_0 : i32, i32
  }
  func.func @transform_4(%arg0: i32) -> (i32, i32) {
    %c0_i32 = arith.constant 0 : i32
    %c0_i32_0 = arith.constant 0 : i32
    %c0_i32_1 = arith.constant 0 : i32
    return %c0_i32, %c0_i32_0 : i32, i32
  }
  func.func @transform_5(%arg0: i32) -> (i32, i32) {
    %c0_i32 = arith.constant 0 : i32
    %c0_i32_0 = arith.constant 0 : i32
    %c0_i32_1 = arith.constant 0 : i32
    return %c0_i32, %c0_i32_0 : i32, i32
  }
  func.func @transform_6(%arg0: i32) -> (i32, i32) {
    %c0_i32 = arith.constant 0 : i32
    %c0_i32_0 = arith.constant 0 : i32
    %c0_i32_1 = arith.constant 0 : i32
    return %c0_i32, %c0_i32_0 : i32, i32
  }
  func.func @transform_7(%arg0: i32) -> (i32, i32, i32) {
    %c0_i32 = arith.constant 0 : i32
    %c0_i32_0 = arith.constant 0 : i32
    %c0_i32_1 = arith.constant 0 : i32
    return %arg0, %c0_i32, %c0_i32_0 : i32, i32, i32
  }
}

</mosaic_0001>

<llo_original>
// kernel: tpu_custom_call.1
$region0: #{tpu_custom_call.1}
  #allocation0 [shape = 'u32[]', space=smem, size = 0x4, offset = 0x4, fixed_abs, tag = 'smem constant byte address 0x4 - core index']
  #allocation1 [shape = 'u32[144,128]{1,0:T(1,128)}', space=vmem, size = 0x12000, scoped, tag = 'internal scratch']
  #allocation2 [shape = 'f32[1,1]{1,0:T(1,128)S(6)}', space=smem, size = 0x200, scoped, tag = 'scoped memory for tpu_custom_call.1']
  %s0 = inlined_call_operand.vmem [shape: bf16[200,32], index: 0, kind: input, shape index: {}]
  %s1 = inlined_call_operand.vmem [shape: bf16[32,128], index: 1, kind: input, shape index: {}]
  %s2 = inlined_call_operand.vmem [shape: f32[1,128], index: 2, kind: input, shape index: {}]
  %s3 = inlined_call_operand.vmem [shape: bf16[128,128], index: 3, kind: input, shape index: {}]
  %s4 = inlined_call_operand.vmem [shape: f32[1,128], index: 4, kind: input, shape index: {}]
  %s5 = inlined_call_operand.vmem [shape: bf16[1,128], index: 5, kind: input, shape index: {}]
  %s6 = inlined_call_operand.<no memory space> [shape: f32[1,1], index: 6, kind: input, shape index: {}]
  %s7 = inlined_call_operand.hbm [shape: f32[2,1,128], index: 7, kind: output, shape index: {}]
  %s8 = sld [smem:[#allocation0]]
  $region61: #{tpu_custom_call.1} parent=0
    _
  %s10 = ssub.s32 1, %s8
  %s11 = scalar_select 0, %s10, %s8
  %12 = sst [smem:[#allocation2]] %s6
  $region1: #{tpu_custom_call.1} parent=0
    #allocation3 [shape = 'u8[1024]{0}', space=vmem, size = 0x400, scoped, tag = 'output window, operand 0']
    #allocation4 [shape = 's32[2]{0}', space=sflag, size = 0x8, scoped, tag = 'scoped memory for tpu_custom_call.1']
    %13 = vsyncpa [#allocation4], 0
    %s14 = scalar_lea.sflag [#allocation4], 1
    %15 = vsyncpa %s14, 0
    loop: start=0, step=1, limit=4
    $region2: #{tpu_custom_call.1} parent=1 // loop_pre_header
      _
    $region3: #{tpu_custom_call.1} parent=1 // loop_header
      %s17 = sphi 0, %s21
      %p18 = scmp.ge.s32.totalorder %s17, 4
      %s27 = sphi 0, %s29
      %s30 = sphi 0, %s27
      %s31 = sphi 0, %s30
      %s47 = sphi 0, %s31
      %s51 = sphi 0, %s51
      %s53 = sphi 0, %s51
      %s54 = sphi 0, %s53
      %s68 = sphi 0, %s54
      %s72 = sphi 0, %s72
      %s74 = sphi 0, %s72
      %s75 = sphi 0, %s74
      %s89 = sphi 0, %s75
      %s93 = sphi 0, %s93
      %s95 = sphi 0, %s93
      %s96 = sphi 0, %s95
      %s110 = sphi 0, %s96
      %s114 = sphi 0, %s114
      %s116 = sphi 0, %s114
      %s117 = sphi 0, %s116
      %s131 = sphi 0, %s117
      %s135 = sphi 0, %s135
      %s137 = sphi 0, %s135
      %s138 = sphi 0, %s137
      %s152 = sphi 0, %s138
      %s156 = sphi 0, %s156
      %s158 = sphi 0, %s156
      %s159 = sphi 0, %s158
      %s173 = sphi 0, %s159
      %s179 = sphi 0, %s181
      %s182 = sphi 0, %s179
      %s183 = sphi 0, %s182
      %s199 = sphi 0, %s183
    $region4: #{tpu_custom_call.1} parent=1 // loop_header_branch
      %20 = sbr.rel (%p18) target = $region8
    $region5: #{tpu_custom_call.1} parent=1 // loop_body
      %s22 = ssub.s32 %s17, 1
      %s23 = ssub.s32 %s17, 2
      %s24 = sadd.s32 %s17, 1
      %s25 = ssub.s32 %s17, %s24
      %p26 = scmp.eq.s32.totalorder %s25, 0
      %s28 = sadd.s32 %s27, 1
      %s29 = scalar_select %p26, %s27, %s28
      %p32 = pneg %p26
      %p33 = scmp.eq.s32.totalorder %s17, 1
      %p34 = por %p32, %p33
      %p35 = scmp.ne.s32.totalorder %s27, %s30
      %p36 = scmp.eq.s32.totalorder %s17, 0
      %p37 = por %p35, %p36
      %p38 = scmp.ne.s32.totalorder %s27, %s30
      %p39 = scmp.eq.s32.totalorder %s22, 1
      %p40 = por %p38, %p39
      %p41 = scmp.ne.s32.totalorder %s30, %s31
      %p42 = scmp.eq.s32.totalorder %s22, 0
      %p43 = por %p41, %p42
      %p44 = scmp.ne.s32.totalorder %s30, %s31
      %p45 = scmp.eq.s32.totalorder %s23, 1
      %p46 = por %p44, %p45
      %p48 = scmp.ne.s32.totalorder %s31, %s47
      %p49 = scmp.eq.s32.totalorder %s23, 0
      %p50 = por %p48, %p49
      %s52 = sadd.s32 %s51, 1
      %p55 = scmp.eq.s32.totalorder %s17, 1
      %p56 = scmp.ne.s32.totalorder %s51, %s53
      %p57 = scmp.eq.s32.totalorder %s17, 0
      %p58 = por %p56, %p57
      %p59 = scmp.ne.s32.totalorder %s51, %s53
      %p60 = scmp.eq.s32.totalorder %s22, 1
      %p61 = por %p59, %p60
      %p62 = scmp.ne.s32.totalorder %s53, %s54
      %p63 = scmp.eq.s32.totalorder %s22, 0
      %p64 = por %p62, %p63
      %p65 = scmp.ne.s32.totalorder %s53, %s54
      %p66 = scmp.eq.s32.totalorder %s23, 1
      %p67 = por %p65, %p66
      %p69 = scmp.ne.s32.totalorder %s54, %s68
      %p70 = scmp.eq.s32.totalorder %s23, 0
      %p71 = por %p69, %p70
      %s73 = sadd.s32 %s72, 1
      %p76 = scmp.eq.s32.totalorder %s17, 1
      %p77 = scmp.ne.s32.totalorder %s72, %s74
      %p78 = scmp.eq.s32.totalorder %s17, 0
      %p79 = por %p77, %p78
      %p80 = scmp.ne.s32.totalorder %s72, %s74
      %p81 = scmp.eq.s32.totalorder %s22, 1
      %p82 = por %p80, %p81
      %p83 = scmp.ne.s32.totalorder %s74, %s75
      %p84 = scmp.eq.s32.totalorder %s22, 0
      %p85 = por %p83, %p84
      %p86 = scmp.ne.s32.totalorder %s74, %s75
      %p87 = scmp.eq.s32.totalorder %s23, 1
      %p88 = por %p86, %p87
      %p90 = scmp.ne.s32.totalorder %s75, %s89
      %p91 = scmp.eq.s32.totalorder %s23, 0
      %p92 = por %p90, %p91
      %s94 = sadd.s32 %s93, 1
      %p97 = scmp.eq.s32.totalorder %s17, 1
      %p98 = scmp.ne.s32.totalorder %s93, %s95
      %p99 = scmp.eq.s32.totalorder %s17, 0
      %p100 = por %p98, %p99
      %p101 = scmp.ne.s32.totalorder %s93, %s95
      %p102 = scmp.eq.s32.totalorder %s22, 1
      %p103 = por %p101, %p102
      %p104 = scmp.ne.s32.totalorder %s95, %s96
      %p105 = scmp.eq.s32.totalorder %s22, 0
      %p106 = por %p104, %p105
      %p107 = scmp.ne.s32.totalorder %s95, %s96
      %p108 = scmp.eq.s32.totalorder %s23, 1
      %p109 = por %p107, %p108
      %p111 = scmp.ne.s32.totalorder %s96, %s110
      %p112 = scmp.eq.s32.totalorder %s23, 0
      %p113 = por %p111, %p112
      %s115 = sadd.s32 %s114, 1
      %p118 = scmp.eq.s32.totalorder %s17, 1
      %p119 = scmp.ne.s32.totalorder %s114, %s116
      %p120 = scmp.eq.s32.totalorder %s17, 0
      %p121 = por %p119, %p120
      %p122 = scmp.ne.s32.totalorder %s114, %s116
      %p123 = scmp.eq.s32.totalorder %s22, 1
      %p124 = por %p122, %p123
      %p125 = scmp.ne.s32.totalorder %s116, %s117
      %p126 = scmp.eq.s32.totalorder %s22, 0
      %p127 = por %p125, %p126
      %p128 = scmp.ne.s32.totalorder %s116, %s117
      %p129 = scmp.eq.s32.totalorder %s23, 1
      %p130 = por %p128, %p129
      %p132 = scmp.ne.s32.totalorder %s117, %s131
      %p133 = scmp.eq.s32.totalorder %s23, 0
      %p134 = por %p132, %p133
      %s136 = sadd.s32 %s135, 1
      %p139 = scmp.eq.s32.totalorder %s17, 1
      %p140 = scmp.ne.s32.totalorder %s135, %s137
      %p141 = scmp.eq.s32.totalorder %s17, 0
      %p142 = por %p140, %p141
      %p143 = scmp.ne.s32.totalorder %s135, %s137
      %p144 = scmp.eq.s32.totalorder %s22, 1
      %p145 = por %p143, %p144
      %p146 = scmp.ne.s32.totalorder %s137, %s138
      %p147 = scmp.eq.s32.totalorder %s22, 0
      %p148 = por %p146, %p147
      %p149 = scmp.ne.s32.totalorder %s137, %s138
      %p150 = scmp.eq.s32.totalorder %s23, 1
      %p151 = por %p149, %p150
      %p153 = scmp.ne.s32.totalorder %s138, %s152
      %p154 = scmp.eq.s32.totalorder %s23, 0
      %p155 = por %p153, %p154
      %s157 = sadd.s32 %s156, 1
      %p160 = scmp.eq.s32.totalorder %s17, 1
      %p161 = scmp.ne.s32.totalorder %s156, %s158
      %p162 = scmp.eq.s32.totalorder %s17, 0
      %p163 = por %p161, %p162
      %p164 = scmp.ne.s32.totalorder %s156, %s158
      %p165 = scmp.eq.s32.totalorder %s22, 1
      %p166 = por %p164, %p165
      %p167 = scmp.ne.s32.totalorder %s158, %s159
      %p168 = scmp.eq.s32.totalorder %s22, 0
      %p169 = por %p167, %p168
      %p170 = scmp.ne.s32.totalorder %s158, %s159
      %p171 = scmp.eq.s32.totalorder %s23, 1
      %p172 = por %p170, %p171
      %p174 = scmp.ne.s32.totalorder %s159, %s173
      %p175 = scmp.eq.s32.totalorder %s23, 0
      %p176 = por %p174, %p175
      %s177 = ssub.s32 %s17, %s24
      %p178 = scmp.eq.s32.totalorder %s177, 0
      %s180 = sadd.s32 %s179, 1
      %s181 = scalar_select %p178, %s179, %s180
      %p184 = pneg %p178
      %p185 = scmp.eq.s32.totalorder %s17, 1
      %p186 = por %p184, %p185
      %p187 = scmp.ne.s32.totalorder %s179, %s182
      %p188 = scmp.eq.s32.totalorder %s17, 0
      %p189 = por %p187, %p188
      %p190 = scmp.ne.s32.totalorder %s179, %s182
      %p191 = scmp.eq.s32.totalorder %s22, 1
      %p192 = por %p190, %p191
      %p193 = scmp.ne.s32.totalorder %s182, %s183
      %p194 = scmp.eq.s32.totalorder %s22, 0
      %p195 = por %p193, %p194
      %p196 = scmp.ne.s32.totalorder %s182, %s183
      %p197 = scmp.eq.s32.totalorder %s23, 1
      %p198 = por %p196, %p197
      %p200 = scmp.ne.s32.totalorder %s183, %s199
      %p201 = scmp.eq.s32.totalorder %s23, 0
      %p202 = por %p200, %p201
      %p203 = scmp.le.s32.totalorder 1, %s17
      %p204 = scmp.lt.s32.totalorder %s17, 3
      %p205 = pnand %p203, %p204
      %p206 = pneg %p205
      // Predicated region
      $region9: #{tpu_custom_call.1} parent=5 // pred_check
        _
      $region10: #{tpu_custom_call.1} parent=5 // pred_check_branch
        %208 = sbr.rel (%p205) target = $region12
      $region11: #{tpu_custom_call.1} parent=5 // pred_region
        %s209 = ssub.s32 %s17, 1
        // Predicated region
        $region13: #{tpu_custom_call.1} parent=11 // pred_check
          %p210 = pneg %p64
        $region14: #{tpu_custom_call.1} parent=11 // pred_check_branch
          %212 = sbr.rel (%p210) target = $region16
        $region15: #{tpu_custom_call.1} parent=11 // pred_region
          _
        $region16: #{tpu_custom_call.1} parent=11 // pred_fallthru
          _
        // Predicated region
        $region17: #{tpu_custom_call.1} parent=11 // pred_check
          %p213 = pneg %p85
        $region18: #{tpu_custom_call.1} parent=11 // pred_check_branch
          %215 = sbr.rel (%p213) target = $region20
        $region19: #{tpu_custom_call.1} parent=11 // pred_region
          _
        $region20: #{tpu_custom_call.1} parent=11 // pred_fallthru
          _
        // Predicated region
        $region21: #{tpu_custom_call.1} parent=11 // pred_check
          %p216 = pneg %p106
        $region22: #{tpu_custom_call.1} parent=11 // pred_check_branch
          %218 = sbr.rel (%p216) target = $region24
        $region23: #{tpu_custom_call.1} parent=11 // pred_region
          _
        $region24: #{tpu_custom_call.1} parent=11 // pred_fallthru
          _
        // Predicated region
        $region25: #{tpu_custom_call.1} parent=11 // pred_check
          %p219 = pneg %p127
        $region26: #{tpu_custom_call.1} parent=11 // pred_check_branch
          %221 = sbr.rel (%p219) target = $region28
        $region27: #{tpu_custom_call.1} parent=11 // pred_region
          _
        $region28: #{tpu_custom_call.1} parent=11 // pred_fallthru
          _
        // Predicated region
        $region29: #{tpu_custom_call.1} parent=11 // pred_check
          %p222 = pneg %p148
        $region30: #{tpu_custom_call.1} parent=11 // pred_check_branch
          %224 = sbr.rel (%p222) target = $region32
        $region31: #{tpu_custom_call.1} parent=11 // pred_region
          _
        $region32: #{tpu_custom_call.1} parent=11 // pred_fallthru
          _
        // Predicated region
        $region33: #{tpu_custom_call.1} parent=11 // pred_check
          %p225 = pneg %p169
        $region34: #{tpu_custom_call.1} parent=11 // pred_check_branch
          %227 = sbr.rel (%p225) target = $region36
        $region35: #{tpu_custom_call.1} parent=11 // pred_region
          _
        $region36: #{tpu_custom_call.1} parent=11 // pred_fallthru
          _
      $region12: #{tpu_custom_call.1} parent=5 // pred_fallthru
        _
      %p228 = scmp.lt.s32.totalorder %s17, 2
      // Predicated region
      $region37: #{tpu_custom_call.1} parent=5 // pred_check
        %p229 = pneg %p228
      $region38: #{tpu_custom_call.1} parent=5 // pred_check_branch
        %231 = sbr.rel (%p229) target = $region40
      $region39: #{tpu_custom_call.1} parent=5 // pred_region
        // Predicated region
        $region41: #{tpu_custom_call.1} parent=39 // pred_check
          %p232 = pneg %p37
        $region42: #{tpu_custom_call.1} parent=39 // pred_check_branch
          %234 = sbr.rel (%p232) target = $region44
        $region43: #{tpu_custom_call.1} parent=39 // pred_region
          %s235 = smul.u32 16, %s17
          %s236 = ssub.s32 25, %s235
          %p237 = scmp.lt.s32.totalorder %s236, 16
          %s238 = scalar_select %p237, %s236, 16
          %s239 = smul.u32 64, %s238
          %p240 = scmp.lt.s32.totalorder %s235, 24
          %s241 = scalar_select %p240, %s235, 24
          %s242 = smul.addr %s241, 4
          %s243 = scalar_lea.vmem %s0, %s242
          %s244 = smul.u32 16, %s17
          %s245 = ssub.s32 25, %s244
          %p246 = scmp.lt.s32.totalorder %s245, 16
          %s247 = scalar_select %p246, %s245, 16
          %s248 = smul.u32 64, %s247
        $region44: #{tpu_custom_call.1} parent=39 // pred_fallthru
          _
      $region40: #{tpu_custom_call.1} parent=5 // pred_fallthru
        _
      %p249 = scmp.le.s32.totalorder 1, %s17
      %p250 = scmp.lt.s32.totalorder %s17, 3
      %p251 = pnand %p249, %p250
      %p252 = pneg %p251
      // Predicated region
      $region45: #{tpu_custom_call.1} parent=5 // pred_check
        _
      $region46: #{tpu_custom_call.1} parent=5 // pred_check_branch
        %254 = sbr.rel (%p251) target = $region48
      $region47: #{tpu_custom_call.1} parent=5 // pred_region
        %s255 = ssub.s32 %s17, 1
        %s256 = smul.u32 16, %s22
        %s257 = ssub.s32 25, %s256
        %p258 = scmp.lt.s32.totalorder %s257, 16
        %s259 = scalar_select %p258, %s257, 16
        %s260 = smul.u32 64, %s259
        %p261 = scmp.lt.s32.totalorder %s256, 24
        %s262 = scalar_select %p261, %s256, 24
        %s263 = smul.addr %s262, 4
        %s264 = scalar_lea.vmem %s0, %s263
        %p265 = pneg %p43
        %p266 = pneg %p40
        %p267 = pneg %p64
        %p268 = pneg %p61
        %p269 = pneg %p85
        %p270 = pneg %p82
        %p271 = pneg %p106
        %p272 = pneg %p103
        %p273 = pneg %p127
        %p274 = pneg %p124
        %p275 = pneg %p148
        %p276 = pneg %p145
        %p277 = pneg %p169
        %p278 = pneg %p166
        %p279 = pneg %p195
        %p280 = pneg %p192
        %s281 = sand.u32 %s182, 1
        %s282 = scalar_lea.sflag [#allocation4], %s281
        %s283 = sand.u32 %s182, 1
        %s284 = scalar_lea.vmem [#allocation3], %s283
        %s285 = smul.u32 16, %s22
        %s286 = ssub.s32 25, %s285
        %p287 = scmp.lt.s32.totalorder %s286, 16
        %s288 = scalar_select %p287, %s286, 16
        %s289 = smul.u32 64, %s288
        %p290 = scmp.lt.s32.totalorder %s285, 24
        %s291 = scalar_select %p290, %s285, 24
        %s292 = smul.addr %s291, 4
        %s293 = scalar_lea.vmem %s0, %s292
        %s294 = smul.u32 16, %s22
        %s295 = ssub.s32 25, %s294
        %p296 = scmp.lt.s32.totalorder %s295, 16
        %s297 = scalar_select %p296, %s295, 16
        %s298 = smul.u32 64, %s297
        %v300 = vld [vmem:[%s293] sm:$0xf]
        %v301 = vld [vmem:[%s293 + $0x4] sm:$0xf]
        %v302 = vld [vmem:[%s293 + $0x8] sm:$0xf]
        %v303 = vld [vmem:[%s293 + $0xc] sm:$0xf]
        %v304 = vld [vmem:[%s293 + $0x10] sm:$0xf]
        %v305 = vld [vmem:[%s293 + $0x14] sm:$0xf]
        %v306 = vld [vmem:[%s293 + $0x18] sm:$0xf]
        %v307 = vld [vmem:[%s293 + $0x1c] sm:$0xf]
        %v308 = vld [vmem:[%s293 + $0x20] sm:$0xf]
        %v309 = vld [vmem:[%s293 + $0x24] sm:$0xf]
        %v310 = vld [vmem:[%s293 + $0x28] sm:$0xf]
        %v311 = vld [vmem:[%s293 + $0x2c] sm:$0xf]
        %v312 = vld [vmem:[%s293 + $0x30] sm:$0xf]
        %v313 = vld [vmem:[%s293 + $0x34] sm:$0xf]
        %v314 = vld [vmem:[%s293 + $0x38] sm:$0xf]
        %v315 = vld [vmem:[%s293 + $0x3c] sm:$0xf]
        %v316 = vld [vmem:[%s1] sm:$0xf]
        %v317 = vld [vmem:[%s1 + $0x4] sm:$0xf]
        %v318 = vld [vmem:[%s1 + $0x8] sm:$0xf]
        %v319 = vld [vmem:[%s1 + $0xc] sm:$0xf]
        %v320 = vld [vmem:[%s2] sm:$0x1]
        %v322 = vlaneseq
        %v323 = vshrl.u32 %v322, 7
        %v324 = vsub.s32 0, %v323
        %v325 = vrot.slane %v320, %v324
        %v343 = vunpack.c.l.b16 %v300
        %v344 = vunpack.c.l.b16 %v301
        %v345 = vunpack.c.l.b16 %v302
        %v346 = vunpack.c.l.b16 %v303
        %v347 = vunpack.c.l.b16 %v304
        %v348 = vunpack.c.l.b16 %v305
        %v349 = vunpack.c.l.b16 %v306
        %v350 = vunpack.c.l.b16 %v307
        %v351 = vunpack.c.l.b16 %v308
        %v352 = vunpack.c.l.b16 %v309
        %v353 = vunpack.c.l.b16 %v310
        %v354 = vunpack.c.l.b16 %v311
        %v355 = vunpack.c.l.b16 %v312
        %v356 = vunpack.c.l.b16 %v313
        %v357 = vunpack.c.l.b16 %v314
        %v358 = vunpack.c.l.b16 %v315
        %v359 = vpack.c.b16 %v344, %v343
        %v360 = vpack.c.b16 %v346, %v345
        %v361 = vpack.c.b16 %v348, %v347
        %v362 = vpack.c.b16 %v350, %v349
        %v363 = vpack.c.b16 %v352, %v351
        %v364 = vpack.c.b16 %v354, %v353
        %v365 = vpack.c.b16 %v356, %v355
        %v366 = vpack.c.b16 %v358, %v357
        %v371 = vunpack.c.l.b16 %v316
        %v372 = vunpack.c.l.b16 %v317
        %v373 = vunpack.c.l.b16 %v318
        %v374 = vunpack.c.l.b16 %v319
        %v375 = vpack.c.b16 %v372, %v371
        %v376 = vpack.c.b16 %v374, %v373
        %vm379 = vcmask 261120
        %v381 = vsel %vm379, %v359, 0
        %v384 = vsel %vm379, %v360, 0
        %v387 = vsel %vm379, %v361, 0
        %v390 = vsel %vm379, %v362, 0
        %v393 = vsel %vm379, %v363, 0
        %v396 = vsel %vm379, %v364, 0
        %v399 = vsel %vm379, %v365, 0
        %v402 = vsel %vm379, %v366, 0
        %404 = vmatprep.subr.bf16.mxu0 0
        %405 = vmatpush1.bf16.msra.mxu0 %v375
        %406 = vmatprep.subr.bf16.mxu0 0
        %407 = vmatpush1.bf16.msra.mxu0 %v376
        %408 = vmatprep.subr.bf16.mxu0 0
        %409 = vmatpush1.bf16.msra.mxu0 0
        %410 = vmatprep.subr.bf16.mxu0 0
        %411 = vmatpush1.bf16.msra.mxu0 0
        %412 = vmatprep.subr.bf16.mxu0 0
        %413 = vmatpush1.bf16.msra.mxu0 0
        %414 = vmatprep.subr.bf16.mxu0 0
        %415 = vmatpush1.bf16.msra.mxu0 0
        %416 = vmatprep.subr.bf16.mxu0 0
        %417 = vmatpush1.bf16.msra.mxu0 0
        %418 = vmatprep.subr.bf16.mxu0 0
        %419 = vmatpush1.bf16.msra.mxu0 0
        %420 = vmatprep.subr.bf16.mxu0 0
        %421 = vmatpush1.bf16.msra.mxu0 0
        %422 = vmatprep.subr.bf16.mxu0 0
        %423 = vmatpush1.bf16.msra.mxu0 0
        %424 = vmatprep.subr.bf16.mxu0 0
        %425 = vmatpush1.bf16.msra.mxu0 0
        %426 = vmatprep.subr.bf16.mxu0 0
        %427 = vmatpush1.bf16.msra.mxu0 0
        %428 = vmatprep.subr.bf16.mxu0 0
        %429 = vmatpush1.bf16.msra.mxu0 0
        %430 = vmatprep.subr.bf16.mxu0 0
        %431 = vmatpush1.bf16.msra.mxu0 0
        %432 = vmatprep.subr.bf16.mxu0 0
        %433 = vmatpush1.bf16.msra.mxu0 0
        %434 = vmatprep.subr.bf16.mxu0 0
        %435 = vmatpush1.bf16.msra.mxu0 0
        %436 = vmatprep.mubr.bf16.mxu0 0
        %437 = vmatmul.mubr.bf16.gmra.mrb[0].mxu0 %v381
        %v438 = vpop.f32.mrb[0].mxu0
        %v439 = vadd.f32 %v325, %v438
        %v440 = vpop.f32.mrb[0].mxu0
        %v441 = vpop.f32.mrb[0].mxu0
        %v442 = vadd.f32 %v325, %v441
        %v443 = vpop.f32.mrb[0].mxu0
        %444 = vmatprep.mubr.bf16.mxu0 0
        %445 = vmatmul.mubr.bf16.gmra.mrb[0].mxu0 %v384
        %v446 = vpop.f32.mrb[0].mxu0
        %v447 = vadd.f32 %v325, %v446
        %v448 = vpop.f32.mrb[0].mxu0
        %v449 = vpop.f32.mrb[0].mxu0
        %v450 = vadd.f32 %v325, %v449
        %v451 = vpop.f32.mrb[0].mxu0
        %452 = vmatprep.mubr.bf16.mxu0 0
        %453 = vmatmul.mubr.bf16.gmra.mrb[0].mxu0 %v387
        %v454 = vpop.f32.mrb[0].mxu0
        %v455 = vadd.f32 %v325, %v454
        %v456 = vpop.f32.mrb[0].mxu0
        %v457 = vpop.f32.mrb[0].mxu0
        %v458 = vadd.f32 %v325, %v457
        %v459 = vpop.f32.mrb[0].mxu0
        %460 = vmatprep.mubr.bf16.mxu0 0
        %461 = vmatmul.mubr.bf16.gmra.mrb[0].mxu0 %v390
        %v462 = vpop.f32.mrb[0].mxu0
        %v463 = vadd.f32 %v325, %v462
        %v464 = vpop.f32.mrb[0].mxu0
        %v465 = vpop.f32.mrb[0].mxu0
        %v466 = vadd.f32 %v325, %v465
        %v467 = vpop.f32.mrb[0].mxu0
        %468 = vmatprep.mubr.bf16.mxu0 0
        %469 = vmatmul.mubr.bf16.gmra.mrb[0].mxu0 %v393
        %v470 = vpop.f32.mrb[0].mxu0
        %v471 = vadd.f32 %v325, %v470
        %v472 = vpop.f32.mrb[0].mxu0
        %v473 = vpop.f32.mrb[0].mxu0
        %v474 = vadd.f32 %v325, %v473
        %v475 = vpop.f32.mrb[0].mxu0
        %476 = vmatprep.mubr.bf16.mxu0 0
        %477 = vmatmul.mubr.bf16.gmra.mrb[0].mxu0 %v396
        %v478 = vpop.f32.mrb[0].mxu0
        %v479 = vadd.f32 %v325, %v478
        %v480 = vpop.f32.mrb[0].mxu0
        %v481 = vpop.f32.mrb[0].mxu0
        %v482 = vadd.f32 %v325, %v481
        %v483 = vpop.f32.mrb[0].mxu0
        %484 = vmatprep.mubr.bf16.mxu0 0
        %485 = vmatmul.mubr.bf16.gmra.mrb[0].mxu0 %v399
        %v486 = vpop.f32.mrb[0].mxu0
        %v487 = vadd.f32 %v325, %v486
        %v488 = vpop.f32.mrb[0].mxu0
        %v489 = vpop.f32.mrb[0].mxu0
        %v490 = vadd.f32 %v325, %v489
        %v491 = vpop.f32.mrb[0].mxu0
        %492 = vmatprep.mubr.bf16.mxu0 0
        %493 = vmatmul.mubr.bf16.gmra.mrb[0].mxu0 %v402
        %v494 = vpop.f32.mrb[0].mxu0
        %v495 = vadd.f32 %v325, %v494
        %v496 = vpop.f32.mrb[0].mxu0
        %v497 = vpop.f32.mrb[0].mxu0
        %v498 = vadd.f32 %v325, %v497
        %v499 = vpop.f32.mrb[0].mxu0
        %500 = vdwg.mxu0
        %v501 = vmax.f32 %v439, 0.0
        %v502 = vmax.f32 %v442, 0.0
        %v503 = vmax.f32 %v447, 0.0
        %v504 = vmax.f32 %v450, 0.0
        %v505 = vmax.f32 %v455, 0.0
        %v506 = vmax.f32 %v458, 0.0
        %v507 = vmax.f32 %v463, 0.0
        %v508 = vmax.f32 %v466, 0.0
        %v509 = vmax.f32 %v471, 0.0
        %v510 = vmax.f32 %v474, 0.0
        %v511 = vmax.f32 %v479, 0.0
        %v512 = vmax.f32 %v482, 0.0
        %v513 = vmax.f32 %v487, 0.0
        %v514 = vmax.f32 %v490, 0.0
        %v515 = vmax.f32 %v495, 0.0
        %v516 = vmax.f32 %v498, 0.0
        %v517 = vpack.c.bf16 %v502, %v501
        %v518 = vpack.c.bf16 %v504, %v503
        %v519 = vpack.c.bf16 %v506, %v505
        %v520 = vpack.c.bf16 %v508, %v507
        %v521 = vpack.c.bf16 %v510, %v509
        %v522 = vpack.c.bf16 %v512, %v511
        %v523 = vpack.c.bf16 %v514, %v513
        %v524 = vpack.c.bf16 %v516, %v515
        %v525 = vld [vmem:[%s3] sm:$0xf]
        %v526 = vld [vmem:[%s3 + $0x4] sm:$0xf]
        %v527 = vld [vmem:[%s3 + $0x8] sm:$0xf]
        %v528 = vld [vmem:[%s3 + $0xc] sm:$0xf]
        %v529 = vld [vmem:[%s3 + $0x10] sm:$0xf]
        %v530 = vld [vmem:[%s3 + $0x14] sm:$0xf]
        %v531 = vld [vmem:[%s3 + $0x18] sm:$0xf]
        %v532 = vld [vmem:[%s3 + $0x1c] sm:$0xf]
        %v533 = vld [vmem:[%s3 + $0x20] sm:$0xf]
        %v534 = vld [vmem:[%s3 + $0x24] sm:$0xf]
        %v535 = vld [vmem:[%s3 + $0x28] sm:$0xf]
        %v536 = vld [vmem:[%s3 + $0x2c] sm:$0xf]
        %v537 = vld [vmem:[%s3 + $0x30] sm:$0xf]
        %v538 = vld [vmem:[%s3 + $0x34] sm:$0xf]
        %v539 = vld [vmem:[%s3 + $0x38] sm:$0xf]
        %v540 = vld [vmem:[%s3 + $0x3c] sm:$0xf]
        %v541 = vld [vmem:[%s4] sm:$0x1]
        %v543 = vlaneseq
        %v544 = vshrl.u32 %v543, 7
        %v545 = vsub.s32 0, %v544
        %v546 = vrot.slane %v541, %v545
        %v564 = vunpack.c.l.b16 %v525
        %v565 = vunpack.c.l.b16 %v526
        %v566 = vunpack.c.l.b16 %v527
        %v567 = vunpack.c.l.b16 %v528
        %v568 = vunpack.c.l.b16 %v529
        %v569 = vunpack.c.l.b16 %v530
        %v570 = vunpack.c.l.b16 %v531
        %v571 = vunpack.c.l.b16 %v532
        %v572 = vunpack.c.l.b16 %v533
        %v573 = vunpack.c.l.b16 %v534
        %v574 = vunpack.c.l.b16 %v535
        %v575 = vunpack.c.l.b16 %v536
        %v576 = vunpack.c.l.b16 %v537
        %v577 = vunpack.c.l.b16 %v538
        %v578 = vunpack.c.l.b16 %v539
        %v579 = vunpack.c.l.b16 %v540
        %v580 = vpack.c.b16 %v565, %v564
        %v581 = vpack.c.b16 %v567, %v566
        %v582 = vpack.c.b16 %v569, %v568
        %v583 = vpack.c.b16 %v571, %v570
        %v584 = vpack.c.b16 %v573, %v572
        %v585 = vpack.c.b16 %v575, %v574
        %v586 = vpack.c.b16 %v577, %v576
        %v587 = vpack.c.b16 %v579, %v578
        %596 = vmatprep.subr.bf16.mxu0 0
        %597 = vmatpush1.bf16.msra.mxu0 %v580
        %598 = vmatprep.subr.bf16.mxu0 0
        %599 = vmatpush1.bf16.msra.mxu0 %v581
        %600 = vmatprep.subr.bf16.mxu0 0
        %601 = vmatpush1.bf16.msra.mxu0 %v582
        %602 = vmatprep.subr.bf16.mxu0 0
        %603 = vmatpush1.bf16.msra.mxu0 %v583
        %604 = vmatprep.subr.bf16.mxu0 0
        %605 = vmatpush1.bf16.msra.mxu0 %v584
        %606 = vmatprep.subr.bf16.mxu0 0
        %607 = vmatpush1.bf16.msra.mxu0 %v585
        %608 = vmatprep.subr.bf16.mxu0 0
        %609 = vmatpush1.bf16.msra.mxu0 %v586
        %610 = vmatprep.subr.bf16.mxu0 0
        %611 = vmatpush1.bf16.msra.mxu0 %v587
        %612 = vmatprep.subr.bf16.mxu0 0
        %613 = vmatpush1.bf16.msra.mxu0 0
        %614 = vmatprep.subr.bf16.mxu0 0
        %615 = vmatpush1.bf16.msra.mxu0 0
        %616 = vmatprep.subr.bf16.mxu0 0
        %617 = vmatpush1.bf16.msra.mxu0 0
        %618 = vmatprep.subr.bf16.mxu0 0
        %619 = vmatpush1.bf16.msra.mxu0 0
        %620 = vmatprep.subr.bf16.mxu0 0
        %621 = vmatpush1.bf16.msra.mxu0 0
        %622 = vmatprep.subr.bf16.mxu0 0
        %623 = vmatpush1.bf16.msra.mxu0 0
        %624 = vmatprep.subr.bf16.mxu0 0
        %625 = vmatpush1.bf16.msra.mxu0 0
        %626 = vmatprep.subr.bf16.mxu0 0
        %627 = vmatpush1.bf16.msra.mxu0 0
        %628 = vmatprep.mubr.bf16.mxu0 0
        %629 = vmatmul.mubr.bf16.gmra.mrb[0].mxu0 %v517
        %v630 = vpop.f32.mrb[0].mxu0
        %v631 = vadd.f32 %v546, %v630
        %v632 = vpop.f32.mrb[0].mxu0
        %v633 = vpop.f32.mrb[0].mxu0
        %v634 = vadd.f32 %v546, %v633
        %v635 = vpop.f32.mrb[0].mxu0
        %636 = vmatprep.mubr.bf16.mxu0 0
        %637 = vmatmul.mubr.bf16.gmra.mrb[0].mxu0 %v518
        %v638 = vpop.f32.mrb[0].mxu0
        %v639 = vadd.f32 %v546, %v638
        %v640 = vpop.f32.mrb[0].mxu0
        %v641 = vpop.f32.mrb[0].mxu0
        %v642 = vadd.f32 %v546, %v641
        %v643 = vpop.f32.mrb[0].mxu0
        %644 = vmatprep.mubr.bf16.mxu0 0
        %645 = vmatmul.mubr.bf16.gmra.mrb[0].mxu0 %v519
        %v646 = vpop.f32.mrb[0].mxu0
        %v647 = vadd.f32 %v546, %v646
        %v648 = vpop.f32.mrb[0].mxu0
        %v649 = vpop.f32.mrb[0].mxu0
        %v650 = vadd.f32 %v546, %v649
        %v651 = vpop.f32.mrb[0].mxu0
        %652 = vmatprep.mubr.bf16.mxu0 0
        %653 = vmatmul.mubr.bf16.gmra.mrb[0].mxu0 %v520
        %v654 = vpop.f32.mrb[0].mxu0
        %v655 = vadd.f32 %v546, %v654
        %v656 = vpop.f32.mrb[0].mxu0
        %v657 = vpop.f32.mrb[0].mxu0
        %v658 = vadd.f32 %v546, %v657
        %v659 = vpop.f32.mrb[0].mxu0
        %660 = vmatprep.mubr.bf16.mxu0 0
        %661 = vmatmul.mubr.bf16.gmra.mrb[0].mxu0 %v521
        %v662 = vpop.f32.mrb[0].mxu0
        %v663 = vadd.f32 %v546, %v662
        %v664 = vpop.f32.mrb[0].mxu0
        %v665 = vpop.f32.mrb[0].mxu0
        %v666 = vadd.f32 %v546, %v665
        %v667 = vpop.f32.mrb[0].mxu0
        %668 = vmatprep.mubr.bf16.mxu0 0
        %669 = vmatmul.mubr.bf16.gmra.mrb[0].mxu0 %v522
        %v670 = vpop.f32.mrb[0].mxu0
        %v671 = vadd.f32 %v546, %v670
        %v672 = vpop.f32.mrb[0].mxu0
        %v673 = vpop.f32.mrb[0].mxu0
        %v674 = vadd.f32 %v546, %v673
        %v675 = vpop.f32.mrb[0].mxu0
        %676 = vmatprep.mubr.bf16.mxu0 0
        %677 = vmatmul.mubr.bf16.gmra.mrb[0].mxu0 %v523
        %v678 = vpop.f32.mrb[0].mxu0
        %v679 = vadd.f32 %v546, %v678
        %v680 = vpop.f32.mrb[0].mxu0
        %v681 = vpop.f32.mrb[0].mxu0
        %v682 = vadd.f32 %v546, %v681
        %v683 = vpop.f32.mrb[0].mxu0
        %684 = vmatprep.mubr.bf16.mxu0 0
        %685 = vmatmul.mubr.bf16.gmra.mrb[0].mxu0 %v524
        %v686 = vpop.f32.mrb[0].mxu0
        %v687 = vadd.f32 %v546, %v686
        %v688 = vpop.f32.mrb[0].mxu0
        %v689 = vpop.f32.mrb[0].mxu0
        %v690 = vadd.f32 %v546, %v689
        %v691 = vpop.f32.mrb[0].mxu0
        %692 = vdwg.mxu0
        %v693 = vmax.f32 %v631, 0.0
        %v694 = vmax.f32 %v634, 0.0
        %v695 = vmax.f32 %v639, 0.0
        %v696 = vmax.f32 %v642, 0.0
        %v697 = vmax.f32 %v647, 0.0
        %v698 = vmax.f32 %v650, 0.0
        %v699 = vmax.f32 %v655, 0.0
        %v700 = vmax.f32 %v658, 0.0
        %v701 = vmax.f32 %v663, 0.0
        %v702 = vmax.f32 %v666, 0.0
        %v703 = vmax.f32 %v671, 0.0
        %v704 = vmax.f32 %v674, 0.0
        %v705 = vmax.f32 %v679, 0.0
        %v706 = vmax.f32 %v682, 0.0
        %v707 = vmax.f32 %v687, 0.0
        %v708 = vmax.f32 %v690, 0.0
        %v709 = vld [vmem:[%s5] sm:$0x1]
        %v710 = vpack.c.bf16 %v694, %v693
        %v711 = vpack.c.bf16 %v696, %v695
        %v712 = vpack.c.bf16 %v698, %v697
        %v713 = vpack.c.bf16 %v700, %v699
        %v714 = vpack.c.bf16 %v702, %v701
        %v715 = vpack.c.bf16 %v704, %v703
        %v716 = vpack.c.bf16 %v706, %v705
        %v717 = vpack.c.bf16 %v708, %v707
        %s718 = sld [smem:[#allocation2]]
        %v719 = vstv %s718
        %720 = vmatprep.subr.bf16.mxu0 0
        %721 = vmatpush1.bf16.xpose.msra.mxu0 %v710
        %722 = vmatprep.subr.bf16.mxu0 0
        %723 = vmatpush1.bf16.xpose.msra.mxu0 %v711
        %724 = vmatprep.subr.bf16.mxu0 0
        %725 = vmatpush1.bf16.xpose.msra.mxu0 %v712
        %726 = vmatprep.subr.bf16.mxu0 0
        %727 = vmatpush1.bf16.xpose.msra.mxu0 %v713
        %728 = vmatprep.subr.bf16.mxu0 0
        %729 = vmatpush1.bf16.xpose.msra.mxu0 %v714
        %730 = vmatprep.subr.bf16.mxu0 0
        %731 = vmatpush1.bf16.xpose.msra.mxu0 %v715
        %732 = vmatprep.subr.bf16.mxu0 0
        %733 = vmatpush1.bf16.xpose.msra.mxu0 %v716
        %734 = vmatprep.subr.bf16.mxu0 0
        %735 = vmatpush1.bf16.xpose.msra.mxu0 %v717
        %736 = vmatprep.subr.bf16.mxu0 0
        %737 = vmatpush1.bf16.xpose.msra.mxu0 0
        %738 = vmatprep.subr.bf16.mxu0 0
        %739 = vmatpush1.bf16.xpose.msra.mxu0 0
        %740 = vmatprep.subr.bf16.mxu0 0
        %741 = vmatpush1.bf16.xpose.msra.mxu0 0
        %742 = vmatprep.subr.bf16.mxu0 0
        %743 = vmatpush1.bf16.xpose.msra.mxu0 0
        %744 = vmatprep.subr.bf16.mxu0 0
        %745 = vmatpush1.bf16.xpose.msra.mxu0 0
        %746 = vmatprep.subr.bf16.mxu0 0
        %747 = vmatpush1.bf16.xpose.msra.mxu0 0
        %748 = vmatprep.subr.bf16.mxu0 0
        %749 = vmatpush1.bf16.xpose.msra.mxu0 0
        %750 = vmatprep.subr.bf16.mxu0 0
        %751 = vmatpush1.bf16.xpose.msra.mxu0 0
        %752 = vmatprep.mubr.bf16.mxu0 0
        %753 = vmatmul.mubr.bf16.gmra.mrb[0].mxu0 %v709
        %v754 = vpop.f32.mrb[0].mxu0
        %v755 = vadd.f32 %v719, %v754
        %v756 = vpop.f32.mrb[0].mxu0
        %v757 = vpop.f32.mrb[0].mxu0
        %v758 = vpop.f32.mrb[0].mxu0
        %759 = vdwg.mxu0
        %v760 = vxor.u32 %v755, 2147483648
        %v761 = vmul.f32 %v760, 1.442695
        %v762 = vpow.pop %v761
        %v763 = vadd.f32 %v762, 1.0
        %v764 = vrcp.pop %v763
        %v765 = vmul.f32 1.0, %v764
        %766 = vst [vmem:[%s284] sm:$0x1] %v765
        %s767 = sand.u32 %s182, 1
        %s768 = scalar_lea.sflag [#allocation4], %s767
        %s769 = sand.u32 %s182, 1
        %s770 = scalar_lea.vmem [#allocation3], %s769
        // Predicated region
        $region49: #{tpu_custom_call.1} parent=47 // pred_check
          %p771 = pneg %p192
        $region50: #{tpu_custom_call.1} parent=47 // pred_check_branch
          %773 = sbr.rel (%p771) target = $region52
        $region51: #{tpu_custom_call.1} parent=47 // pred_region
          %s775 = ssub.s32 16, 16
          %776 = vsyncadd %s768, %s775
          %s777 = smul.addr %s22, 16
          %s778 = scalar_lea.hbm %s7, %s777
          %s780 = sshll.u32 %s770, 4
          %s781 = int_to_ptr.vmem [resolvable:$true] %s780
          %783 = dma.vmem_to_hbm [thread:$0]  %s781, 16, %s778, %s768
        $region52: #{tpu_custom_call.1} parent=47 // pred_fallthru
          _
      $region48: #{tpu_custom_call.1} parent=5 // pred_fallthru
        _
      %p784 = scmp.le.s32.totalorder 2, %s17
      // Predicated region
      $region53: #{tpu_custom_call.1} parent=5 // pred_check
        %p785 = pneg %p784
      $region54: #{tpu_custom_call.1} parent=5 // pred_check_branch
        %787 = sbr.rel (%p785) target = $region56
      $region55: #{tpu_custom_call.1} parent=5 // pred_region
        %s788 = ssub.s32 %s17, 2
        // Predicated region
        $region57: #{tpu_custom_call.1} parent=55 // pred_check
          %p789 = pneg %p198
        $region58: #{tpu_custom_call.1} parent=55 // pred_check_branch
          %791 = sbr.rel (%p789) target = $region60
        $region59: #{tpu_custom_call.1} parent=55 // pred_region
          %s792 = sand.u32 %s183, 1
          %s793 = scalar_lea.sflag [#allocation4], %s792
          %s794 = sand.u32 %s183, 1
          %s795 = scalar_lea.vmem [#allocation3], %s794
          %796 = dma.done %s793, 16
        $region60: #{tpu_custom_call.1} parent=55 // pred_fallthru
          _
      $region56: #{tpu_custom_call.1} parent=5 // pred_fallthru
        _
    $region6: #{tpu_custom_call.1} parent=1 // loop_footer
      %s21 = sadd.s32 1, %s17
    $region7: #{tpu_custom_call.1} parent=1 // loop_footer_branch
      %16 = sbr.rel target = $region3
    $region8: #{tpu_custom_call.1} parent=1 // loop_exit
      _
    %797 = vsyncpa [#allocation4], 1
    %s798 = scalar_lea.sflag [#allocation4], 1
    %799 = vsyncpa %s798, 1

</llo_original>
